<compile_context>
chip_gen: v5e
topology: v5e:2x2
jax: 0.10.0
libtpu: 0.0.40
codegen_flags: <defaults>
</compile_context>

<pallas_src>
import functools

import jax
import jax.numpy as jnp
from jax import lax
from jax.experimental import pallas as pl
from jax.experimental.pallas import tpu as pltpu


# ---------------------------------------------------------------------------
# Kernels (lane-dense layout: batch on the lane axis)
# ---------------------------------------------------------------------------

def _henon_kernel(xT_ref, yT_ref, KT_ref, K_ref, bT_ref, haT_ref, outT_ref):
    """out^T = h * grad_H(x)^T - y^T  for H(x) = sum_j a_j tanh((xK)_j + b_j).

    Layout: xT/yT/outT are (dim, TB); KT is (width, dim); K is (dim, width);
    bT/haT are (width, 1) with the step size already folded into haT = h * a.
    """
    xT = xT_ref[...]                       # (dim, TB)
    yT = yT_ref[...]                       # (dim, TB)
    KT = KT_ref[...]                       # (width, dim)
    K = K_ref[...]                         # (dim, width)
    bT = bT_ref[...]                       # (width, 1)  f32
    haT = haT_ref[...]                     # (width, 1)  f32  (= h * a)

    # z^T = K^T @ x^T  (plain NN matmul on the MXU, batch on lanes)
    zT = jnp.dot(KT, xT, preferred_element_type=jnp.float32) + bT   # (width, TB)
    s = jnp.tanh(zT)
    dsigT = haT * (1.0 - s * s)                                     # (width, TB)
    # grad^T = K @ dsig^T
    gradT = jnp.dot(K, dsigT, preferred_element_type=jnp.float32)   # (dim, TB)

    outT_ref[...] = (gradT - yT.astype(jnp.float32)).astype(outT_ref.dtype)


def _henon_stack_kernel(pT_ref, qT_ref, KT_ref, K_ref, bT_ref, haT_ref,
                        pT_out_ref, qT_out_ref, *, reverse, unroll):
    """Apply L Henon layers with the state resident on-chip (lane-dense layout).

    KT_ref: (L, width, dim), K_ref: (L, dim, width), bT/haT: (L, width, 1).
    Forward  layer l: (p, q) -> (q, -p + h * grad_H_l(q))
    Reverse  layer l: (p, q) -> (-q + (-h) * grad_H_l(p), p), layers applied in
    reverse index order (inverse-composition convention).  The (+-h) sign is
    already folded into haT by the wrapper.
    """
    L = K_ref.shape[0]
    pT = pT_ref[...].astype(jnp.float32)   # (dim, TB)
    qT = qT_ref[...].astype(jnp.float32)   # (dim, TB)

    def body(l, carry):
        p, q = carry
        idx = (L - 1 - l) if reverse else l
        KT = KT_ref[idx]                   # (width, dim)
        K = K_ref[idx]                     # (dim, width)
        bT = bT_ref[idx]                   # (width, 1)
        haT = haT_ref[idx]                 # (width, 1)
        x, y = (p, q) if reverse else (q, p)
        zT = jnp.dot(KT, x, preferred_element_type=jnp.float32) + bT
        s = jnp.tanh(zT)
        dsigT = haT * (1.0 - s * s)
        gradT = jnp.dot(K, dsigT, preferred_element_type=jnp.float32)
        out = gradT - y
        return (out, p) if reverse else (q, out)

    pT_f, qT_f = lax.fori_loop(0, L, body, (pT, qT), unroll=unroll)
    pT_out_ref[...] = pT_f.astype(pT_out_ref.dtype)
    qT_out_ref[...] = qT_f.astype(qT_out_ref.dtype)


# ---------------------------------------------------------------------------
# Tiling / cost helpers
# ---------------------------------------------------------------------------

def _pick_batch_tile(batch, max_tb=4096):
    """Lane-aligned batch tile.

    batch <= 128: one tile covering the whole batch (lane-partial but tiny).
    Otherwise: a multiple of 128, capped at max_tb, chosen ~batch/2 so there are
    >= 2 grid steps (lets dimension_semantics=("parallel",) shard over both v7x
    TensorCores) whenever the batch allows it.  Non-divisible batches get a
    masked tail block via a cdiv grid.
    """
    if batch <= 128:
        return batch
    half = -(-((batch + 1) // 2) // 128) * 128   # ceil(batch/2) rounded up to 128
    return max(128, min(max_tb, half))


def _cost(batch, dim, width, num_layers, itemsize):
    flops = 4 * batch * dim * width * num_layers       # two (dim x width) MACs/row/layer
    transcendentals = batch * width * num_layers       # tanh
    bytes_accessed = (4 * batch * dim) * itemsize \
        + num_layers * (2 * dim * width + 2 * width) * 4
    return pl.CostEstimate(flops=flops, transcendentals=transcendentals,
                           bytes_accessed=bytes_accessed)


# ---------------------------------------------------------------------------
# Transposed-layout entry points (state is (dim, batch), batch lane-dense)
# ---------------------------------------------------------------------------

def henon_layer_t(pT, qT, h, params, reverse=False):
    """Single Henon layer on (dim, batch)-layout state."""
    K, b, a = params["K"], params["b"], params["a"]   # (dim,width), (1,width), (1,width)
    dim, batch = pT.shape
    width = K.shape[1]
    hh = -h if reverse else h
    xT, yT = (pT, qT) if reverse else (qT, pT)

    KT = jnp.swapaxes(K, 0, 1)                                        # (width, dim)
    bT = jnp.reshape(b, (width, 1)).astype(jnp.float32)               # (width, 1)
    haT = (jnp.reshape(a, (width, 1)).astype(jnp.float32)
           * jnp.asarray(hh, dtype=jnp.float32))                      # h folded into scale

    tb = _pick_batch_tile(batch)
    nb = pl.cdiv(batch, tb)

    outT = pl.pallas_call(
        _henon_kernel,
        out_shape=jax.ShapeDtypeStruct((dim, batch), yT.dtype),
        grid=(nb,),
        in_specs=[
            pl.BlockSpec((dim, tb), lambda i: (0, i)),       # x^T (batch-tiled, lane-dense)
            pl.BlockSpec((dim, tb), lambda i: (0, i)),       # y^T
            pl.BlockSpec((width, dim), lambda i: (0, 0)),    # K^T  (untiled)
            pl.BlockSpec((dim, width), lambda i: (0, 0)),    # K    (untiled)
            pl.BlockSpec((width, 1), lambda i: (0, 0)),      # b^T
            pl.BlockSpec((width, 1), lambda i: (0, 0)),      # (h*a)^T
        ],
        out_specs=pl.BlockSpec((dim, tb), lambda i: (0, i)),
        compiler_params=pltpu.CompilerParams(
            dimension_semantics=("parallel",)),
        cost_estimate=_cost(batch, dim, width, 1, jnp.dtype(yT.dtype).itemsize),
    )(xT, yT, KT, K, bT, haT)

    if reverse:
        return outT, pT                  # (-q + (-h)*grad(p), p)
    return qT, outT                      # (q, -p + h*grad(q))


def henon_stack_t(pT, qT, h, stacked_params, reverse=False):
    """Fused pass through L stacked Henon layers on (dim, batch)-layout state."""
    K, b, a = stacked_params["K"], stacked_params["b"], stacked_params["a"]
    dim, batch = pT.shape
    num_layers, _, width = K.shape
    hh = -h if reverse else h

    KT = jnp.swapaxes(K, 1, 2)                                         # (L, width, dim)
    bT = jnp.reshape(b, (num_layers, width, 1)).astype(jnp.float32)
    haT = (jnp.reshape(a, (num_layers, width, 1)).astype(jnp.float32)
           * jnp.asarray(hh, dtype=jnp.float32))

    tb = _pick_batch_tile(batch)
    nb = pl.cdiv(batch, tb)
    unroll = True if num_layers <= 16 else 4   # full unroll only for short stacks

    kernel = functools.partial(_henon_stack_kernel, reverse=reverse, unroll=unroll)

    pT_out, qT_out = pl.pallas_call(
        kernel,
        out_shape=(jax.ShapeDtypeStruct((dim, batch), pT.dtype),
                   jax.ShapeDtypeStruct((dim, batch), qT.dtype)),
        grid=(nb,),
        in_specs=[
            pl.BlockSpec((dim, tb), lambda i: (0, i)),                     # p^T
            pl.BlockSpec((dim, tb), lambda i: (0, i)),                     # q^T
            pl.BlockSpec((num_layers, width, dim), lambda i: (0, 0, 0)),   # K^T stack
            pl.BlockSpec((num_layers, dim, width), lambda i: (0, 0, 0)),   # K   stack
            pl.BlockSpec((num_layers, width, 1), lambda i: (0, 0, 0)),     # b^T stack
            pl.BlockSpec((num_layers, width, 1), lambda i: (0, 0, 0)),     # (h*a)^T stack
        ],
        out_specs=(pl.BlockSpec((dim, tb), lambda i: (0, i)),
                   pl.BlockSpec((dim, tb), lambda i: (0, i))),
        compiler_params=pltpu.CompilerParams(
            dimension_semantics=("parallel",)),
        cost_estimate=_cost(batch, dim, width, num_layers,
                            jnp.dtype(pT.dtype).itemsize),
    )(pT, qT, KT, K, bT, haT)

    return pT_out, qT_out


# ---------------------------------------------------------------------------
# (batch, dim) wrappers — API-compatible with Layer.forward
# ---------------------------------------------------------------------------

def henon_layer(p, q, h, params, reverse=False):
    """Pallas-backed forward of strupnet layers/H.py::Layer.forward (one layer)."""
    p_new_T, q_new_T = henon_layer_t(p.T, q.T, h, params, reverse=reverse)
    if reverse:
        return p_new_T.T, p              # q passthrough is the original p, untouched
    return q, q_new_T.T                  # p passthrough is the original q, untouched


def henon_stack(p, q, h, stacked_params, reverse=False):
    """Fused forward/reverse pass through L stacked Henon layers (one pallas_call).

    stacked_params: {"K": (L,dim,width), "b": (L,1,width), "a": (L,1,width)}.
    reverse=True applies the layers in reverse index order with the reverse map.
    """
    pT_out, qT_out = henon_stack_t(p.T, q.T, h, stacked_params, reverse=reverse)
    return pT_out.T, qT_out.T


# ---------------------------------------------------------------------------
# Parameters & pure-JAX reference
# ---------------------------------------------------------------------------

def init_params(key, dim, width, dtype=jnp.float32):
    kK, kb, ka = jax.random.split(key, 3)
    return {
        "K": (0.1 * jax.random.normal(kK, (dim, width))).astype(dtype),
        "b": (0.1 * jax.random.normal(kb, (1, width))).astype(dtype),
        "a": (0.1 * jax.random.normal(ka, (1, width))).astype(dtype),
    }


def stack_params(layer_params):
    return {
        "K": jnp.stack([lp["K"] for lp in layer_params], axis=0),
        "b": jnp.stack([lp["b"] for lp in layer_params], axis=0),
        "a": jnp.stack([lp["a"] for lp in layer_params], axis=0),
    }


def _reference_layer(p, q, h, params, reverse=False):
    """Pure-JAX reference matching the PyTorch module."""
    K, b, a = params["K"], params["b"], params["a"]

    def grad_H(x):
        s = jnp.tanh(x @ K + b)
        return (a * (1.0 - s * s)) @ K.T

    if reverse:
        h = -h
        return -q + h * grad_H(p), p
    return q, -p + h * grad_H(q)


def _reference_stack(p, q, h, layer_params, reverse=False):
    layers = list(reversed(layer_params)) if reverse else layer_params
    for prm in layers:
        p, q = _reference_layer(p, q, h, prm, reverse=reverse)
    return p, q


# ---------------------------------------------------------------------------
# Demo / correctness check
# ---------------------------------------------------------------------------

if __name__ == "__main__":
    dim, width, batch, n_layers = 4, 32, 2, 3
    h = 0.1

    key = jax.random.PRNGKey(0)
    keys = jax.random.split(key, n_layers + 4)
    layer_params = [init_params(keys[i], dim, width) for i in range(n_layers)]
    p = jax.random.normal(keys[-4], (batch, dim), dtype=jnp.float32)
    q = jax.random.normal(keys[-3], (batch, dim), dtype=jnp.float32)

    # --- single layer, forward ---
    p1, q1 = henon_layer(p, q, h, layer_params[0], reverse=False)
    jax.block_until_ready((p1, q1))
    p1r, q1r = _reference_layer(p, q, h, layer_params[0], reverse=False)
    assert jnp.allclose(p1, p1r, atol=1e-4, rtol=1e-4)
    assert jnp.allclose(q1, q1r, atol=1e-4, rtol=1e-4)

    # --- single layer, reverse ---
    p2, q2 = henon_layer(p, q, h, layer_params[0], reverse=True)
    jax.block_until_ready((p2, q2))
    p2r, q2r = _reference_layer(p, q, h, layer_params[0], reverse=True)
    assert jnp.allclose(p2, p2r, atol=1e-4, rtol=1e-4)
    assert jnp.allclose(q2, q2r, atol=1e-4, rtol=1e-4)

    # --- fused L-layer stack, forward ---
    stacked = stack_params(layer_params)
    ps, qs = henon_stack(p, q, h, stacked, reverse=False)
    jax.block_until_ready((ps, qs))
    psr, qsr = _reference_stack(p, q, h, layer_params, reverse=False)
    assert jnp.allclose(ps, psr, atol=1e-4, rtol=1e-4)
    assert jnp.allclose(qs, qsr, atol=1e-4, rtol=1e-4)

    # --- fused L-layer stack, reverse (layers applied in reverse order) ---
    pr, qr = henon_stack(p, q, h, stacked, reverse=True)
    jax.block_until_ready((pr, qr))
    prr, qrr = _reference_stack(p, q, h, layer_params, reverse=True)
    assert jnp.allclose(pr, prr, atol=1e-4, rtol=1e-4)
    assert jnp.allclose(qr, qrr, atol=1e-4, rtol=1e-4)

    # --- larger batch: exercises 128-aligned tiling, >=2 grid steps, masked tail ---
    big = 384                                   # tb=256 -> nb=2, tail block half-full
    pb = jax.random.normal(keys[-2], (big, dim), dtype=jnp.float32)
    qb = jax.random.normal(keys[-1], (big, dim), dtype=jnp.float32)
    pbs, qbs = henon_stack(pb, qb, h, stacked, reverse=False)
    jax.block_until_ready((pbs, qbs))
    pbsr, qbsr = _reference_stack(pb, qb, h, layer_params, reverse=False)
    assert jnp.allclose(pbs, pbsr, atol=1e-4, rtol=1e-4)
    assert jnp.allclose(qbs, qbsr, atol=1e-4, rtol=1e-4)

    print("KERNEL_OK")
</pallas_src>

<mosaic_0001>
module attributes {stable_mosaic.version = 11 : i64} {
  func.func @_henon_kernel(%arg0: i32, %arg1: memref<4x2xf32, #tpu.memory_space<vmem>>, %arg2: memref<4x2xf32, #tpu.memory_space<vmem>>, %arg3: memref<32x4xf32, #tpu.memory_space<vmem>>, %arg4: memref<4x32xf32, #tpu.memory_space<vmem>>, %arg5: memref<32x1xf32, #tpu.memory_space<vmem>>, %arg6: memref<32x1xf32, #tpu.memory_space<vmem>>, %arg7: memref<4x2xf32, #tpu.memory_space<vmem>>) attributes {dimension_semantics = [#tpu.dimension_semantics<parallel>], iteration_bounds = array<i64: 1>, scalar_prefetch = 0 : i64, scratch_operands = 0 : i64, tpu.core_type = #tpu.core_type<tc>, window_params = [{transform_indices = @transform_0, window_bounds = array<i64: 4, 2>}, {transform_indices = @transform_1, window_bounds = array<i64: 4, 2>}, {pipeline_mode = #tpu.pipeline_mode<synchronous>, transform_indices = @transform_2, window_bounds = array<i64: 32, 4>}, {pipeline_mode = #tpu.pipeline_mode<synchronous>, transform_indices = @transform_3, window_bounds = array<i64: 4, 32>}, {pipeline_mode = #tpu.pipeline_mode<synchronous>, transform_indices = @transform_4, window_bounds = array<i64: 32, 1>}, {pipeline_mode = #tpu.pipeline_mode<synchronous>, transform_indices = @transform_5, window_bounds = array<i64: 32, 1>}, {transform_indices = @transform_6, window_bounds = array<i64: 4, 2>}]} {
    %c0 = arith.constant 0 : index
    %c0_0 = arith.constant 0 : index
    %0 = vector.load %arg1[%c0, %c0_0] : memref<4x2xf32, #tpu.memory_space<vmem>>, vector<4x2xf32>
    %c0_1 = arith.constant 0 : index
    %c0_2 = arith.constant 0 : index
    %1 = vector.load %arg2[%c0_1, %c0_2] : memref<4x2xf32, #tpu.memory_space<vmem>>, vector<4x2xf32>
    %c0_3 = arith.constant 0 : index
    %c0_4 = arith.constant 0 : index
    %2 = vector.load %arg3[%c0_3, %c0_4] : memref<32x4xf32, #tpu.memory_space<vmem>>, vector<32x4xf32>
    %c0_5 = arith.constant 0 : index
    %c0_6 = arith.constant 0 : index
    %3 = vector.load %arg4[%c0_5, %c0_6] : memref<4x32xf32, #tpu.memory_space<vmem>>, vector<4x32xf32>
    %c0_7 = arith.constant 0 : index
    %c0_8 = arith.constant 0 : index
    %4 = vector.load %arg5[%c0_7, %c0_8] : memref<32x1xf32, #tpu.memory_space<vmem>>, vector<32x1xf32>
    %c0_9 = arith.constant 0 : index
    %c0_10 = arith.constant 0 : index
    %5 = vector.load %arg6[%c0_9, %c0_10] : memref<32x1xf32, #tpu.memory_space<vmem>>, vector<32x1xf32>
    %cst = arith.constant dense<0.000000e+00> : vector<32x2xf32>
    %6 = tpu.matmul %2, %0, %cst {dimension_numbers = #tpu.dot_dimension_numbers<[1], [0], [0], [1], [0, 0, 1, 1], [], []>} : vector<32x4xf32>, vector<4x2xf32>, vector<32x2xf32> -> vector<32x2xf32>
    %7 = vector.broadcast %4 : vector<32x1xf32> to vector<32x2xf32>
    %8 = arith.addf %6, %7 : vector<32x2xf32>
    %9 = math.tanh %8 : vector<32x2xf32>
    %10 = arith.mulf %9, %9 : vector<32x2xf32>
    %cst_11 = arith.constant 1.000000e+00 : f32
    %11 = vector.broadcast %cst_11 : f32 to vector<32x2xf32>
    %12 = arith.subf %11, %10 : vector<32x2xf32>
    %13 = vector.broadcast %5 : vector<32x1xf32> to vector<32x2xf32>
    %14 = arith.mulf %13, %12 : vector<32x2xf32>
    %cst_12 = arith.constant dense<0.000000e+00> : vector<4x2xf32>
    %15 = tpu.matmul %3, %14, %cst_12 {dimension_numbers = #tpu.dot_dimension_numbers<[1], [0], [0], [1], [0, 0, 1, 1], [], []>} : vector<4x32xf32>, vector<32x2xf32>, vector<4x2xf32> -> vector<4x2xf32>
    %16 = arith.subf %15, %1 : vector<4x2xf32>
    %c0_13 = arith.constant 0 : index
    %c0_14 = arith.constant 0 : index
    %17 = vector.load %arg7[%c0_13, %c0_14] : memref<4x2xf32, #tpu.memory_space<vmem>>, vector<4x2xf32>
    tpu.vector_store %arg7[%c0_13, %c0_14], %16 {strides = array<i32>} : memref<4x2xf32, #tpu.memory_space<vmem>>, vector<4x2xf32>,
    return
  }
  func.func @transform_0(%arg0: i32) -> (i32, i32) {
    %c0_i32 = arith.constant 0 : i32
    %c0_i32_0 = arith.constant 0 : i32
    return %c0_i32, %arg0 : i32, i32
  }
  func.func @transform_1(%arg0: i32) -> (i32, i32) {
    %c0_i32 = arith.constant 0 : i32
    %c0_i32_0 = arith.constant 0 : i32
    return %c0_i32, %arg0 : i32, i32
  }
  func.func @transform_2(%arg0: i32) -> (i32, i32) {
    %c0_i32 = arith.constant 0 : i32
    %c0_i32_0 = arith.constant 0 : i32
    %c0_i32_1 = arith.constant 0 : i32
    return %c0_i32, %c0_i32_0 : i32, i32
  }
  func.func @transform_3(%arg0: i32) -> (i32, i32) {
    %c0_i32 = arith.constant 0 : i32
    %c0_i32_0 = arith.constant 0 : i32
    %c0_i32_1 = arith.constant 0 : i32
    return %c0_i32, %c0_i32_0 : i32, i32
  }
  func.func @transform_4(%arg0: i32) -> (i32, i32) {
    %c0_i32 = arith.constant 0 : i32
    %c0_i32_0 = arith.constant 0 : i32
    %c0_i32_1 = arith.constant 0 : i32
    return %c0_i32, %c0_i32_0 : i32, i32
  }
  func.func @transform_5(%arg0: i32) -> (i32, i32) {
    %c0_i32 = arith.constant 0 : i32
    %c0_i32_0 = arith.constant 0 : i32
    %c0_i32_1 = arith.constant 0 : i32
    return %c0_i32, %c0_i32_0 : i32, i32
  }
  func.func @transform_6(%arg0: i32) -> (i32, i32) {
    %c0_i32 = arith.constant 0 : i32
    %c0_i32_0 = arith.constant 0 : i32
    return %c0_i32, %arg0 : i32, i32
  }
}

</mosaic_0001>

<llo_original>
// kernel: tpu_custom_call.1
$region0: #{tpu_custom_call.1}
  #allocation0 [shape = 'u32[]', space=smem, size = 0x4, offset = 0x4, fixed_abs, tag = 'smem constant byte address 0x4 - core index']
  #allocation1 [shape = 'u32[72,128]{1,0:T(1,128)}', space=vmem, size = 0x9000, scoped, tag = 'internal scratch']
  %s0 = inlined_call_operand.vmem [shape: f32[4,2], index: 0, kind: input, shape index: {}]
  %s1 = inlined_call_operand.vmem [shape: f32[4,2], index: 1, kind: input, shape index: {}]
  %s2 = inlined_call_operand.vmem [shape: f32[32,4], index: 2, kind: input, shape index: {}]
  %s3 = inlined_call_operand.vmem [shape: f32[4,32], index: 3, kind: input, shape index: {}]
  %s4 = inlined_call_operand.vmem [shape: f32[32,1], index: 4, kind: input, shape index: {}]
  %s5 = inlined_call_operand.vmem [shape: f32[32,1], index: 5, kind: input, shape index: {}]
  %s6 = inlined_call_operand.vmem [shape: f32[4,2], index: 6, kind: output, shape index: {}]
  %s7 = sld [smem:[#allocation0]]
  $region34: #{tpu_custom_call.1} parent=0
    _
  %s9 = ssub.s32 1, %s7
  %s10 = scalar_select 0, %s9, %s7
  // Predicated region
  $region2: #{tpu_custom_call.1} parent=0 // pred_check
    _
  $region3: #{tpu_custom_call.1} parent=0 // pred_check_branch
    %12 = sbr.rel (0) target = $region5
  $region4: #{tpu_custom_call.1} parent=0 // pred_region
    _
  $region5: #{tpu_custom_call.1} parent=0 // pred_fallthru
    _
  // Predicated region
  $region6: #{tpu_custom_call.1} parent=0 // pred_check
    _
  $region7: #{tpu_custom_call.1} parent=0 // pred_check_branch
    %14 = sbr.rel (0) target = $region9
  $region8: #{tpu_custom_call.1} parent=0 // pred_region
    _
  $region9: #{tpu_custom_call.1} parent=0 // pred_fallthru
    _
  // Predicated region
  $region10: #{tpu_custom_call.1} parent=0 // pred_check
    _
  $region11: #{tpu_custom_call.1} parent=0 // pred_check_branch
    %16 = sbr.rel (0) target = $region13
  $region12: #{tpu_custom_call.1} parent=0 // pred_region
    _
  $region13: #{tpu_custom_call.1} parent=0 // pred_fallthru
    _
  // Predicated region
  $region14: #{tpu_custom_call.1} parent=0 // pred_check
    _
  $region15: #{tpu_custom_call.1} parent=0 // pred_check_branch
    %18 = sbr.rel (0) target = $region17
  $region16: #{tpu_custom_call.1} parent=0 // pred_region
    _
  $region17: #{tpu_custom_call.1} parent=0 // pred_fallthru
    _
  // Predicated region
  $region18: #{tpu_custom_call.1} parent=0 // pred_check
    _
  $region19: #{tpu_custom_call.1} parent=0 // pred_check_branch
    %20 = sbr.rel (0) target = $region21
  $region20: #{tpu_custom_call.1} parent=0 // pred_region
    _
  $region21: #{tpu_custom_call.1} parent=0 // pred_fallthru
    _
  // Predicated region
  $region22: #{tpu_custom_call.1} parent=0 // pred_check
    _
  $region23: #{tpu_custom_call.1} parent=0 // pred_check_branch
    %22 = sbr.rel (0) target = $region25
  $region24: #{tpu_custom_call.1} parent=0 // pred_region
    _
  $region25: #{tpu_custom_call.1} parent=0 // pred_fallthru
    _
  %v23 = vld [vmem:[%s0] sm:$0xf]
  %v24 = vld [vmem:[%s1] sm:$0xf]
  %v25 = vld [vmem:[%s2] sm:$0xff]
  %v26 = vld [vmem:[%s2 + $0x8] sm:$0xff]
  %v27 = vld [vmem:[%s2 + $0x10] sm:$0xff]
  %v28 = vld [vmem:[%s2 + $0x18] sm:$0xff]
  %v29 = vld [vmem:[%s3] sm:$0xf]
  %v30 = vld [vmem:[%s4] sm:$0xff]
  %v31 = vld [vmem:[%s4 + $0x8] sm:$0xff]
  %v32 = vld [vmem:[%s4 + $0x10] sm:$0xff]
  %v33 = vld [vmem:[%s4 + $0x18] sm:$0xff]
  %v34 = vld [vmem:[%s5] sm:$0xff]
  %v35 = vld [vmem:[%s5 + $0x8] sm:$0xff]
  %v36 = vld [vmem:[%s5 + $0x10] sm:$0xff]
  %v37 = vld [vmem:[%s5 + $0x18] sm:$0xff]
  %39 = vset.pattern.permute.xlu0 0
  %40 = vperm.xlu0 %39, %v30
  %v41 = vpop.permute.xlu0 %40
  %44 = vset.pattern.permute.xlu0 0
  %45 = vperm.xlu0 %44, %v31
  %v46 = vpop.permute.xlu0 %45
  %49 = vset.pattern.permute.xlu0 0
  %50 = vperm.xlu0 %49, %v32
  %v51 = vpop.permute.xlu0 %50
  %54 = vset.pattern.permute.xlu0 0
  %55 = vperm.xlu0 %54, %v33
  %v56 = vpop.permute.xlu0 %55
  %vm58 = vcmask 31744
  %v60 = vsel %vm58, %v25, 0
  %v63 = vsel %vm58, %v26, 0
  %v66 = vsel %vm58, %v27, 0
  %v69 = vsel %vm58, %v28, 0
  %vm71 = vcmask 1043456
  %v73 = vsel %vm71, %v23, 0
  %75 = vmatpush.msra.mxu0 0.0
  %76 = vmatpush.msra.mxu0 0.0
  %77 = vmatpush.msra.mxu0 0.0
  %78 = vmatpush.msra.mxu0 0.0
  %79 = vmatpush.msra.mxu0 0.0
  %80 = vmatpush.msra.mxu0 0.0
  %81 = vmatpush.msra.mxu0 0.0
  %82 = vmatpush.msra.mxu0 0.0
  %83 = vmatpush.msra.mxu0 0.0
  %84 = vmatpush.msra.mxu0 0.0
  %85 = vmatpush.msra.mxu0 0.0
  %86 = vmatpush.msra.mxu0 0.0
  %87 = vmatpush.msra.mxu0 0.0
  %88 = vmatpush.msra.mxu0 0.0
  %89 = vmatpush.msra.mxu0 0.0
  %90 = vmatpush.msra.mxu0 %v73
  %91 = vmatmul.f32.gmra.mxu0 %v60
  %v92 = vpop.f32.mrf.mxu0
  %v93 = vadd.f32 %v41, %v92
  %94 = vmatmul.f32.gmra.mxu0 %v63
  %v95 = vpop.f32.mrf.mxu0
  %v96 = vadd.f32 %v46, %v95
  %97 = vmatmul.f32.gmra.mxu0 %v66
  %v98 = vpop.f32.mrf.mxu0
  %v99 = vadd.f32 %v51, %v98
  %100 = vmatmul.f32.gmra.mxu0 %v69
  %v101 = vpop.f32.mrf.mxu0
  %v102 = vadd.f32 %v56, %v101
  %103 = vdwg.mxu0
  %v104 = vtanh.pop %v93
  %v105 = vtanh.pop %v96
  %v106 = vtanh.pop %v99
  %v107 = vtanh.pop %v102
  %v108 = vmul.f32 %v104, %v104
  %v109 = vmul.f32 %v105, %v105
  %v110 = vmul.f32 %v106, %v106
  %v111 = vmul.f32 %v107, %v107
  %v112 = vsub.f32 1.0, %v108
  %v113 = vsub.f32 1.0, %v109
  %v114 = vsub.f32 1.0, %v110
  %v115 = vsub.f32 1.0, %v111
  %117 = vset.pattern.permute.xlu0 0
  %118 = vperm.xlu0 %117, %v34
  %v119 = vpop.permute.xlu0 %118
  %122 = vset.pattern.permute.xlu0 0
  %123 = vperm.xlu0 %122, %v35
  %v124 = vpop.permute.xlu0 %123
  %127 = vset.pattern.permute.xlu0 0
  %128 = vperm.xlu0 %127, %v36
  %v129 = vpop.permute.xlu0 %128
  %132 = vset.pattern.permute.xlu0 0
  %133 = vperm.xlu0 %132, %v37
  %v134 = vpop.permute.xlu0 %133
  %v136 = vmul.f32 %v119, %v112
  %v137 = vmul.f32 %v124, %v113
  %v138 = vmul.f32 %v129, %v114
  %v139 = vmul.f32 %v134, %v115
  %vm140 = vcmask 261120
  %v142 = vsel %vm140, %v29, 0
  %144 = vmatpush.msra.mxu0 0.0
  %145 = vmatpush.msra.mxu0 0.0
  %146 = vmatpush.msra.mxu0 0.0
  %147 = vmatpush.msra.mxu0 0.0
  %148 = vmatpush.msra.mxu0 0.0
  %149 = vmatpush.msra.mxu0 0.0
  %150 = vmatpush.msra.mxu0 0.0
  %151 = vmatpush.msra.mxu0 0.0
  %152 = vmatpush.msra.mxu0 0.0
  %153 = vmatpush.msra.mxu0 0.0
  %154 = vmatpush.msra.mxu0 0.0
  %155 = vmatpush.msra.mxu0 0.0
  %156 = vmatpush.msra.mxu0 %v139
  %157 = vmatpush.msra.mxu0 %v138
  %158 = vmatpush.msra.mxu0 %v137
  %159 = vmatpush.msra.mxu0 %v136
  %160 = vmatmul.f32.gmra.mxu0 %v142
  %v161 = vpop.f32.mrf.mxu0
  %v162 = vadd.f32 0.0, %v161
  %163 = vdwg.mxu0
  %v164 = vsub.f32 %v162, %v24
  %vm165 = vcmask 11264
  %166 = vst.msk [vmem:[%s6] sm:$0xf] %vm165, %v164
  // Predicated region
  $region26: #{tpu_custom_call.1} parent=0 // pred_check
    _
  $region27: #{tpu_custom_call.1} parent=0 // pred_check_branch
    %168 = sbr.rel (0) target = $region29
  $region28: #{tpu_custom_call.1} parent=0 // pred_region
    _
  $region29: #{tpu_custom_call.1} parent=0 // pred_fallthru
    _
  // Predicated region
  $region30: #{tpu_custom_call.1} parent=0 // pred_check
    _
  $region31: #{tpu_custom_call.1} parent=0 // pred_check_branch
    %170 = sbr.rel (0) target = $region33
  $region32: #{tpu_custom_call.1} parent=0 // pred_region
    _
  $region33: #{tpu_custom_call.1} parent=0 // pred_fallthru
    _

</llo_original>
